<compile_context>
chip_gen: v7x
topology: tpu7x:2x2x1
jax: 0.10.0
libtpu: 0.0.40
codegen_flags: <defaults>
</compile_context>

<pallas_src>
import jax
import jax.numpy as jnp
from jax.experimental import pallas as pl
from jax.experimental.pallas import tpu as pltpu

IN_F = 4        # fc1 in_features
IN_PAD = 8      # sublane-aligned input width (cols: 0..3 = x, 4 = ones feed, 5..7 = 0)
HID = 40        # fc1 out_features / fc2 in_features
OUT_F = 2       # fc2 out_features
HID_PAD = 128   # lane-aligned hidden width
OUT_PAD = 128   # lane-aligned output width (sliced back to OUT_F in the wrapper)
MAX_TB = 1024   # cap on batch rows per grid step (out tile 512 KiB, 2x-buffered ~1 MiB)


def noisynet2_kernel(x_ref, w1_ref, w2_ref, o_ref):
    # fc1 + ReLU.  Bias is row IN_F of w1, driven by x[:, IN_F] == 1 (ones feed).
    # Column HID of h becomes relu(1) == 1; columns > HID stay 0.
    h = jnp.maximum(
        jnp.dot(x_ref[...], w1_ref[...], preferred_element_type=jnp.float32), 0.0)
    # fc2.  Row HID of w2 holds b2, fed by h[:, HID] == 1; zero padding is inert.
    o_ref[...] = jnp.dot(h, w2_ref[...],
                         preferred_element_type=jnp.float32).astype(o_ref.dtype)


def _choose_tb(batch, target_steps=2, max_tb=MAX_TB):
    """~2 grid steps keeps both v7x TensorCores busy on the 'parallel' axis while a
    single-TC chip (v5e/v6e) only pays one extra ~0.35us launch; tiles are capped at
    max_tb rows for VMEM safety and tiny batches collapse to a single step."""
    tb = pl.cdiv(batch, target_steps * 8) * 8     # multiple of 8 (sublane aligned)
    return int(max(8, min(max_tb, tb)))


def noisynet2_forward(x, packed):
    B = x.shape[0]
    # Ones-feed column folds the fc1 bias into the matmul; 3 zero columns give the
    # MXU a sublane-aligned K=8 LHS.  (x is tiny: B x 4 f32, so this copy is cheap.)
    x_pad = jnp.concatenate(
        [x.astype(jnp.float32),
         jnp.ones((B, 1), jnp.float32),
         jnp.zeros((B, IN_PAD - IN_F - 1), jnp.float32)], axis=1)

    tb = _choose_tb(B)
    out = pl.pallas_call(
        noisynet2_kernel,
        out_shape=jax.ShapeDtypeStruct((B, OUT_PAD), jnp.float32),
        grid=(pl.cdiv(B, tb),),
        in_specs=[
            pl.BlockSpec((tb, IN_PAD), lambda i: (i, 0)),
            pl.BlockSpec((IN_PAD, HID_PAD), lambda i: (0, 0)),    # fetched once
            pl.BlockSpec((HID_PAD, OUT_PAD), lambda i: (0, 0)),   # fetched once
        ],
        out_specs=pl.BlockSpec((tb, OUT_PAD), lambda i: (i, 0)),
        compiler_params=pltpu.CompilerParams(dimension_semantics=("parallel",)),
    )(x_pad, packed["w1"], packed["w2"])
    return out[:, :OUT_F]


def init_params(key):
    """NoisyLinear-style init (mu ~ U(+-1/sqrt(fan_in)), sigma = 0.017, eps ~ N(0,1)).
    Weights stored pre-transposed as (in, out); biases as (out,)."""
    ks = jax.random.split(key, 8)
    sigma_init = 0.017

    def layer(k_mu_w, k_eps_w, k_mu_b, k_eps_b, fan_in, fan_out):
        bound = 1.0 / jnp.sqrt(jnp.float32(fan_in))
        w_mu = jax.random.uniform(k_mu_w, (fan_in, fan_out), jnp.float32, -bound, bound)
        w_sigma = jnp.full((fan_in, fan_out), sigma_init, jnp.float32)
        w_eps = jax.random.normal(k_eps_w, (fan_in, fan_out), jnp.float32)
        b_mu = jax.random.uniform(k_mu_b, (fan_out,), jnp.float32, -bound, bound)
        b_sigma = jnp.full((fan_out,), sigma_init, jnp.float32)
        b_eps = jax.random.normal(k_eps_b, (fan_out,), jnp.float32)
        return w_mu, w_sigma, w_eps, b_mu, b_sigma, b_eps

    w1_mu, w1_sigma, w1_eps, b1_mu, b1_sigma, b1_eps = layer(ks[0], ks[1], ks[2], ks[3], IN_F, HID)
    w2_mu, w2_sigma, w2_eps, b2_mu, b2_sigma, b2_eps = layer(ks[4], ks[5], ks[6], ks[7], HID, OUT_F)
    return dict(
        w1_mu=w1_mu, w1_sigma=w1_sigma, w1_eps=w1_eps,
        b1_mu=b1_mu, b1_sigma=b1_sigma, b1_eps=b1_eps,
        w2_mu=w2_mu, w2_sigma=w2_sigma, w2_eps=w2_eps,
        b2_mu=b2_mu, b2_sigma=b2_sigma, b2_eps=b2_eps,
    )


def pack_params(p):
    """Once per eps draw (init or NoisyNet2.sample()): do the noisy combine
    (mu + sigma*eps), fold biases into extra weight rows, and zero-pad to
    lane-aligned (8,128)/(128,128) slabs."""
    w1 = p["w1_mu"] + p["w1_sigma"] * p["w1_eps"]    # (IN_F, HID)
    b1 = p["b1_mu"] + p["b1_sigma"] * p["b1_eps"]    # (HID,)
    w2 = p["w2_mu"] + p["w2_sigma"] * p["w2_eps"]    # (HID, OUT_F)
    b2 = p["b2_mu"] + p["b2_sigma"] * p["b2_eps"]    # (OUT_F,)

    p1 = jnp.zeros((IN_PAD, HID_PAD), jnp.float32)
    p1 = p1.at[:IN_F, :HID].set(w1)
    p1 = p1.at[IN_F, :HID].set(b1)
    # "ones feed": x[:, IN_F] == 1 drives the b1 row; p1[IN_F, HID] == 1 makes
    # h[:, HID] == activation(1), which must equal 1 for the b2 fold below.
    # NOTE: this relies on the hidden activation being ReLU (relu(1) == 1);
    # it breaks silently if ReLU is ever swapped for GELU/tanh.
    p1 = p1.at[IN_F, HID].set(1.0)
    assert float(jnp.maximum(jnp.float32(1.0), 0.0)) == 1.0  # relu(1) == 1

    p2 = jnp.zeros((HID_PAD, OUT_PAD), jnp.float32)
    p2 = p2.at[:HID, :OUT_F].set(w2)
    p2 = p2.at[HID, :OUT_F].set(b2)
    return dict(w1=p1, w2=p2)


def reference_forward(x, p):
    w1 = p["w1_mu"] + p["w1_sigma"] * p["w1_eps"]
    b1 = p["b1_mu"] + p["b1_sigma"] * p["b1_eps"]
    w2 = p["w2_mu"] + p["w2_sigma"] * p["w2_eps"]
    b2 = p["b2_mu"] + p["b2_sigma"] * p["b2_eps"]
    h = jnp.maximum(x @ w1 + b1, 0.0)
    return h @ w2 + b2


if __name__ == "__main__":
    key = jax.random.PRNGKey(0)
    k_x, k_p = jax.random.split(key)

    B = 16                                              # small demo batch -> 2 grid tiles of 8
    x = jax.random.normal(k_x, (B, IN_F), jnp.float32)  # state input, (batch, 4)
    params = init_params(k_p)
    packed = pack_params(params)                        # once per eps draw, not per call

    out = noisynet2_forward(x, packed)
    out = jax.block_until_ready(out)

    ref = reference_forward(x, params)
    assert out.shape == (B, OUT_F)
    assert jnp.allclose(out, ref, atol=1e-5, rtol=1e-4)

    # TODO(synk): NoisyNet2.sample() (re-drawing eps) stays host-side; just rebuild
    # the eps planes and re-run pack_params.

    print("KERNEL_OK")
</pallas_src>

<mosaic_0001>
module attributes {stable_mosaic.version = 11 : i64} {
  func.func @noisynet2_kernel(%arg0: i32, %arg1: memref<8x8xf32, #tpu.memory_space<vmem>>, %arg2: memref<8x128xf32, #tpu.memory_space<vmem>>, %arg3: memref<128x128xf32, #tpu.memory_space<vmem>>, %arg4: memref<8x128xf32, #tpu.memory_space<vmem>>) attributes {dimension_semantics = [#tpu.dimension_semantics<parallel>], iteration_bounds = array<i64: 2>, scalar_prefetch = 0 : i64, scratch_operands = 0 : i64, tpu.core_type = #tpu.core_type<tc>, window_params = [{transform_indices = @transform_0, window_bounds = array<i64: 8, 8>}, {pipeline_mode = #tpu.pipeline_mode<synchronous>, transform_indices = @transform_1, window_bounds = array<i64: 8, 128>}, {pipeline_mode = #tpu.pipeline_mode<synchronous>, transform_indices = @transform_2, window_bounds = array<i64: 128, 128>}, {transform_indices = @transform_3, window_bounds = array<i64: 8, 128>}]} {
    %c0 = arith.constant 0 : index
    %c0_0 = arith.constant 0 : index
    %0 = vector.load %arg1[%c0, %c0_0] : memref<8x8xf32, #tpu.memory_space<vmem>>, vector<8x8xf32>
    %c0_1 = arith.constant 0 : index
    %c0_2 = arith.constant 0 : index
    %1 = vector.load %arg2[%c0_1, %c0_2] : memref<8x128xf32, #tpu.memory_space<vmem>>, vector<8x128xf32>
    %cst = arith.constant dense<0.000000e+00> : vector<8x128xf32>
    %2 = tpu.matmul %0, %1, %cst {dimension_numbers = #tpu.dot_dimension_numbers<[1], [0], [0], [1], [0, 0, 1, 1], [], []>} : vector<8x8xf32>, vector<8x128xf32>, vector<8x128xf32> -> vector<8x128xf32>
    %cst_3 = arith.constant 0.000000e+00 : f32
    %3 = vector.broadcast %cst_3 : f32 to vector<8x128xf32>
    %4 = arith.maximumf %2, %3 : vector<8x128xf32>
    %c0_4 = arith.constant 0 : index
    %c0_5 = arith.constant 0 : index
    %5 = vector.load %arg3[%c0_4, %c0_5] : memref<128x128xf32, #tpu.memory_space<vmem>>, vector<128x128xf32>
    %cst_6 = arith.constant dense<0.000000e+00> : vector<8x128xf32>
    %6 = tpu.matmul %4, %5, %cst_6 {dimension_numbers = #tpu.dot_dimension_numbers<[1], [0], [0], [1], [0, 0, 1, 1], [], []>} : vector<8x128xf32>, vector<128x128xf32>, vector<8x128xf32> -> vector<8x128xf32>
    %c0_7 = arith.constant 0 : index
    %c0_8 = arith.constant 0 : index
    %7 = vector.load %arg4[%c0_7, %c0_8] : memref<8x128xf32, #tpu.memory_space<vmem>>, vector<8x128xf32>
    tpu.vector_store %arg4[%c0_7, %c0_8], %6 {strides = array<i32>} : memref<8x128xf32, #tpu.memory_space<vmem>>, vector<8x128xf32>,
    return
  }
  func.func @transform_0(%arg0: i32) -> (i32, i32) {
    %c0_i32 = arith.constant 0 : i32
    %c0_i32_0 = arith.constant 0 : i32
    return %arg0, %c0_i32 : i32, i32
  }
  func.func @transform_1(%arg0: i32) -> (i32, i32) {
    %c0_i32 = arith.constant 0 : i32
    %c0_i32_0 = arith.constant 0 : i32
    %c0_i32_1 = arith.constant 0 : i32
    return %c0_i32, %c0_i32_0 : i32, i32
  }
  func.func @transform_2(%arg0: i32) -> (i32, i32) {
    %c0_i32 = arith.constant 0 : i32
    %c0_i32_0 = arith.constant 0 : i32
    %c0_i32_1 = arith.constant 0 : i32
    return %c0_i32, %c0_i32_0 : i32, i32
  }
  func.func @transform_3(%arg0: i32) -> (i32, i32) {
    %c0_i32 = arith.constant 0 : i32
    %c0_i32_0 = arith.constant 0 : i32
    return %arg0, %c0_i32 : i32, i32
  }
}

</mosaic_0001>

<llo_original>
// kernel: tpu_custom_call.1
$region0: #{tpu_custom_call.1}
  #allocation0 [shape = 'u32[]', space=smem, size = 0x4, offset = 0x4, fixed_abs, tag = 'smem constant byte address 0x4 - core index']
  #allocation1 [shape = 'u32[144,128]{1,0:T(1,128)}', space=vmem, size = 0x12000, scoped, tag = 'internal scratch']
  %s0 = inlined_call_operand.vmem [shape: f32[16,8], index: 0, kind: input, shape index: {}]
  %s1 = inlined_call_operand.vmem [shape: f32[8,128], index: 1, kind: input, shape index: {}]
  %s2 = inlined_call_operand.hbm [shape: f32[128,128], index: 2, kind: input, shape index: {}]
  %s3 = inlined_call_operand.hbm [shape: f32[16,128], index: 3, kind: output, shape index: {}]
  %s4 = sld [smem:[#allocation0]]
  $region49: #{tpu_custom_call.1} parent=0
    _
  %s6 = ssub.s32 1, %s4
  %s7 = scalar_select 0, %s6, %s4
  $region1: #{tpu_custom_call.1} parent=0
    #allocation2 [shape = 'u8[65536]{0}', space=vmem, size = 0x10000, scoped, tag = 'input window, operand 2, single buffered']
    #allocation3 [shape = 's32[2]{0}', space=sflag, size = 0x8, scoped, tag = 'scoped memory for tpu_custom_call.1']
    #allocation4 [shape = 's32[2]{0}', space=sflag, size = 0x8, scoped, tag = 'scoped memory for tpu_custom_call.1']
    #allocation5 [shape = 'u8[8192]{0}', space=vmem, size = 0x2000, scoped, tag = 'output window, operand 0']
    %8 = vsyncpa [#allocation3], 0
    %9 = vsyncpa [#allocation4], 0
    %s10 = scalar_lea.sflag [#allocation4], 1
    %11 = vsyncpa %s10, 0
    loop: start=0, step=1, limit=4
    $region2: #{tpu_custom_call.1} parent=1 // loop_pre_header
      _
    $region3: #{tpu_custom_call.1} parent=1 // loop_header
      %s13 = sphi 0, %s17
      %p14 = scmp.ge.s32.totalorder %s13, 4
      %s23 = sphi 0, %s25
      %s26 = sphi 0, %s23
      %s27 = sphi 0, %s26
      %s43 = sphi 0, %s27
      %s47 = sphi 0, %s47
      %s49 = sphi 0, %s47
      %s50 = sphi 0, %s49
      %s64 = sphi 0, %s50
      %s68 = sphi 0, %s68
      %s70 = sphi 0, %s68
      %s71 = sphi 0, %s70
      %s85 = sphi 0, %s71
      %s91 = sphi 0, %s93
      %s94 = sphi 0, %s91
      %s95 = sphi 0, %s94
      %s111 = sphi 0, %s95
    $region4: #{tpu_custom_call.1} parent=1 // loop_header_branch
      %16 = sbr.rel (%p14) target = $region8
    $region5: #{tpu_custom_call.1} parent=1 // loop_body
      %s18 = ssub.s32 %s13, 1
      %s19 = ssub.s32 %s13, 2
      %s20 = sadd.s32 %s13, 1
      %s21 = ssub.s32 %s13, %s20
      %p22 = scmp.eq.s32.totalorder %s21, 0
      %s24 = sadd.s32 %s23, 1
      %s25 = scalar_select %p22, %s23, %s24
      %p28 = pneg %p22
      %p29 = scmp.eq.s32.totalorder %s13, 1
      %p30 = por %p28, %p29
      %p31 = scmp.ne.s32.totalorder %s23, %s26
      %p32 = scmp.eq.s32.totalorder %s13, 0
      %p33 = por %p31, %p32
      %p34 = scmp.ne.s32.totalorder %s23, %s26
      %p35 = scmp.eq.s32.totalorder %s18, 1
      %p36 = por %p34, %p35
      %p37 = scmp.ne.s32.totalorder %s26, %s27
      %p38 = scmp.eq.s32.totalorder %s18, 0
      %p39 = por %p37, %p38
      %p40 = scmp.ne.s32.totalorder %s26, %s27
      %p41 = scmp.eq.s32.totalorder %s19, 1
      %p42 = por %p40, %p41
      %p44 = scmp.ne.s32.totalorder %s27, %s43
      %p45 = scmp.eq.s32.totalorder %s19, 0
      %p46 = por %p44, %p45
      %s48 = sadd.s32 %s47, 1
      %p51 = scmp.eq.s32.totalorder %s13, 1
      %p52 = scmp.ne.s32.totalorder %s47, %s49
      %p53 = scmp.eq.s32.totalorder %s13, 0
      %p54 = por %p52, %p53
      %p55 = scmp.ne.s32.totalorder %s47, %s49
      %p56 = scmp.eq.s32.totalorder %s18, 1
      %p57 = por %p55, %p56
      %p58 = scmp.ne.s32.totalorder %s49, %s50
      %p59 = scmp.eq.s32.totalorder %s18, 0
      %p60 = por %p58, %p59
      %p61 = scmp.ne.s32.totalorder %s49, %s50
      %p62 = scmp.eq.s32.totalorder %s19, 1
      %p63 = por %p61, %p62
      %p65 = scmp.ne.s32.totalorder %s50, %s64
      %p66 = scmp.eq.s32.totalorder %s19, 0
      %p67 = por %p65, %p66
      %s69 = sadd.s32 %s68, 1
      %p72 = scmp.eq.s32.totalorder %s13, 1
      %p73 = scmp.ne.s32.totalorder %s68, %s70
      %p74 = scmp.eq.s32.totalorder %s13, 0
      %p75 = por %p73, %p74
      %p76 = scmp.ne.s32.totalorder %s68, %s70
      %p77 = scmp.eq.s32.totalorder %s18, 1
      %p78 = por %p76, %p77
      %p79 = scmp.ne.s32.totalorder %s70, %s71
      %p80 = scmp.eq.s32.totalorder %s18, 0
      %p81 = por %p79, %p80
      %p82 = scmp.ne.s32.totalorder %s70, %s71
      %p83 = scmp.eq.s32.totalorder %s19, 1
      %p84 = por %p82, %p83
      %p86 = scmp.ne.s32.totalorder %s71, %s85
      %p87 = scmp.eq.s32.totalorder %s19, 0
      %p88 = por %p86, %p87
      %s89 = ssub.s32 %s13, %s20
      %p90 = scmp.eq.s32.totalorder %s89, 0
      %s92 = sadd.s32 %s91, 1
      %s93 = scalar_select %p90, %s91, %s92
      %p96 = pneg %p90
      %p97 = scmp.eq.s32.totalorder %s13, 1
      %p98 = por %p96, %p97
      %p99 = scmp.ne.s32.totalorder %s91, %s94
      %p100 = scmp.eq.s32.totalorder %s13, 0
      %p101 = por %p99, %p100
      %p102 = scmp.ne.s32.totalorder %s91, %s94
      %p103 = scmp.eq.s32.totalorder %s18, 1
      %p104 = por %p102, %p103
      %p105 = scmp.ne.s32.totalorder %s94, %s95
      %p106 = scmp.eq.s32.totalorder %s18, 0
      %p107 = por %p105, %p106
      %p108 = scmp.ne.s32.totalorder %s94, %s95
      %p109 = scmp.eq.s32.totalorder %s19, 1
      %p110 = por %p108, %p109
      %p112 = scmp.ne.s32.totalorder %s95, %s111
      %p113 = scmp.eq.s32.totalorder %s19, 0
      %p114 = por %p112, %p113
      %p115 = scmp.le.s32.totalorder 1, %s13
      %p116 = scmp.lt.s32.totalorder %s13, 3
      %p117 = pnand %p115, %p116
      %p118 = pneg %p117
      // Predicated region
      $region9: #{tpu_custom_call.1} parent=5 // pred_check
        _
      $region10: #{tpu_custom_call.1} parent=5 // pred_check_branch
        %120 = sbr.rel (%p117) target = $region12
      $region11: #{tpu_custom_call.1} parent=5 // pred_region
        %s121 = ssub.s32 %s13, 1
        // Predicated region
        $region13: #{tpu_custom_call.1} parent=11 // pred_check
          %p122 = pneg %p60
        $region14: #{tpu_custom_call.1} parent=11 // pred_check_branch
          %124 = sbr.rel (%p122) target = $region16
        $region15: #{tpu_custom_call.1} parent=11 // pred_region
          _
        $region16: #{tpu_custom_call.1} parent=11 // pred_fallthru
          _
        // Predicated region
        $region17: #{tpu_custom_call.1} parent=11 // pred_check
          %p125 = pneg %p81
        $region18: #{tpu_custom_call.1} parent=11 // pred_check_branch
          %127 = sbr.rel (%p125) target = $region20
        $region19: #{tpu_custom_call.1} parent=11 // pred_region
          %s129 = ssub.s32 2048, 2048
          %130 = vsyncadd [#allocation3], %s129
          %s131 = sshll.u32 [#allocation2], 4
          %s132 = int_to_ptr.vmem [resolvable:$true] %s131
          %137 = dma.hbm_to_vmem [thread:$0]  %s2, 2048, %s132, [#allocation3], 128, 128, 8
        $region20: #{tpu_custom_call.1} parent=11 // pred_fallthru
          _
      $region12: #{tpu_custom_call.1} parent=5 // pred_fallthru
        _
      %p138 = scmp.lt.s32.totalorder %s13, 2
      // Predicated region
      $region21: #{tpu_custom_call.1} parent=5 // pred_check
        %p139 = pneg %p138
      $region22: #{tpu_custom_call.1} parent=5 // pred_check_branch
        %141 = sbr.rel (%p139) target = $region24
      $region23: #{tpu_custom_call.1} parent=5 // pred_region
        // Predicated region
        $region25: #{tpu_custom_call.1} parent=23 // pred_check
          %p142 = pneg %p33
        $region26: #{tpu_custom_call.1} parent=23 // pred_check_branch
          %144 = sbr.rel (%p142) target = $region28
        $region27: #{tpu_custom_call.1} parent=23 // pred_region
          %p145 = scmp.lt.s32.totalorder %s13, 1
          %s146 = scalar_select %p145, %s13, 1
          %s147 = smul.addr %s146, 8
          %s148 = scalar_lea.vmem %s0, %s147
        $region28: #{tpu_custom_call.1} parent=23 // pred_fallthru
          _
      $region24: #{tpu_custom_call.1} parent=5 // pred_fallthru
        _
      %p149 = scmp.le.s32.totalorder 1, %s13
      %p150 = scmp.lt.s32.totalorder %s13, 3
      %p151 = pnand %p149, %p150
      %p152 = pneg %p151
      // Predicated region
      $region29: #{tpu_custom_call.1} parent=5 // pred_check
        _
      $region30: #{tpu_custom_call.1} parent=5 // pred_check_branch
        %154 = sbr.rel (%p151) target = $region32
      $region31: #{tpu_custom_call.1} parent=5 // pred_region
        %s155 = ssub.s32 %s13, 1
        // Predicated region
        $region33: #{tpu_custom_call.1} parent=31 // pred_check
          %p156 = pneg %p81
        $region34: #{tpu_custom_call.1} parent=31 // pred_check_branch
          %158 = sbr.rel (%p156) target = $region36
        $region35: #{tpu_custom_call.1} parent=31 // pred_region
          %159 = dma.done [#allocation3], 2048
        $region36: #{tpu_custom_call.1} parent=31 // pred_fallthru
          _
        %p160 = scmp.lt.s32.totalorder %s18, 1
        %s161 = scalar_select %p160, %s18, 1
        %s162 = smul.addr %s161, 8
        %s163 = scalar_lea.vmem %s0, %s162
        %p164 = pneg %p39
        %p165 = pneg %p36
        %p166 = pneg %p60
        %p167 = pneg %p57
        %p168 = pneg %p81
        %p169 = pneg %p78
        %p170 = pneg %p107
        %p171 = pneg %p104
        %s172 = sand.u32 %s94, 1
        %s173 = scalar_lea.sflag [#allocation4], %s172
        %s174 = sand.u32 %s94, 1
        %s175 = smul.addr %s174, 8
        %s176 = scalar_lea.vmem [#allocation5], %s175
        %p177 = scmp.lt.s32.totalorder %s18, 1
        %s178 = scalar_select %p177, %s18, 1
        %s179 = smul.addr %s178, 8
        %s180 = scalar_lea.vmem %s0, %s179
        %v181 = vld [vmem:[%s180] sm:$0xff]
        %v182 = vld [vmem:[%s1] sm:$0xff]
        %vm183 = vcmask 64512
        %v185 = vsel %vm183, %v181, 0
        %187 = vmatprep.subr.mxu0 0.0
        %188 = vmatpush1.msra.mxu0 %v182
        %189 = vmatprep.subr.mxu0 0.0
        %190 = vmatpush1.msra.mxu0 0.0
        %191 = vmatprep.subr.mxu0 0.0
        %192 = vmatpush1.msra.mxu0 0.0
        %193 = vmatprep.subr.mxu0 0.0
        %194 = vmatpush1.msra.mxu0 0.0
        %195 = vmatprep.subr.mxu0 0.0
        %196 = vmatpush1.msra.mxu0 0.0
        %197 = vmatprep.subr.mxu0 0.0
        %198 = vmatpush1.msra.mxu0 0.0
        %199 = vmatprep.subr.mxu0 0.0
        %200 = vmatpush1.msra.mxu0 0.0
        %201 = vmatprep.subr.mxu0 0.0
        %202 = vmatpush1.msra.mxu0 0.0
        %203 = vmatprep.subr.mxu0 0.0
        %204 = vmatpush1.msra.mxu0 0.0
        %205 = vmatprep.subr.mxu0 0.0
        %206 = vmatpush1.msra.mxu0 0.0
        %207 = vmatprep.subr.mxu0 0.0
        %208 = vmatpush1.msra.mxu0 0.0
        %209 = vmatprep.subr.mxu0 0.0
        %210 = vmatpush1.msra.mxu0 0.0
        %211 = vmatprep.subr.mxu0 0.0
        %212 = vmatpush1.msra.mxu0 0.0
        %213 = vmatprep.subr.mxu0 0.0
        %214 = vmatpush1.msra.mxu0 0.0
        %215 = vmatprep.subr.mxu0 0.0
        %216 = vmatpush1.msra.mxu0 0.0
        %217 = vmatprep.subr.mxu0 0.0
        %218 = vmatpush1.msra.mxu0 0.0
        %219 = vmatprep.subr.mxu0 0.0
        %220 = vmatpush1.msra.mxu0 0.0
        %221 = vmatprep.subr.mxu0 0.0
        %222 = vmatpush1.msra.mxu0 0.0
        %223 = vmatprep.subr.mxu0 0.0
        %224 = vmatpush1.msra.mxu0 0.0
        %225 = vmatprep.subr.mxu0 0.0
        %226 = vmatpush1.msra.mxu0 0.0
        %227 = vmatprep.subr.mxu0 0.0
        %228 = vmatpush1.msra.mxu0 0.0
        %229 = vmatprep.subr.mxu0 0.0
        %230 = vmatpush1.msra.mxu0 0.0
        %231 = vmatprep.subr.mxu0 0.0
        %232 = vmatpush1.msra.mxu0 0.0
        %233 = vmatprep.subr.mxu0 0.0
        %234 = vmatpush1.msra.mxu0 0.0
        %235 = vmatprep.subr.mxu0 0.0
        %236 = vmatpush1.msra.mxu0 0.0
        %237 = vmatprep.subr.mxu0 0.0
        %238 = vmatpush1.msra.mxu0 0.0
        %239 = vmatprep.subr.mxu0 0.0
        %240 = vmatpush1.msra.mxu0 0.0
        %241 = vmatprep.subr.mxu0 0.0
        %242 = vmatpush1.msra.mxu0 0.0
        %243 = vmatprep.subr.mxu0 0.0
        %244 = vmatpush1.msra.mxu0 0.0
        %245 = vmatprep.subr.mxu0 0.0
        %246 = vmatpush1.msra.mxu0 0.0
        %247 = vmatprep.subr.mxu0 0.0
        %248 = vmatpush1.msra.mxu0 0.0
        %249 = vmatprep.subr.mxu0 0.0
        %250 = vmatpush1.msra.mxu0 0.0
        %251 = vmatprep.mubr.f32.mxu0 0.0
        %252 = vmatmul.mubr.f32.gmra.mrb[0].mxu0 %v185
        %v253 = vpop.f32.mrb[0].mxu0
        %v254 = vadd.f32 0.0, %v253
        %v255 = vpop.f32.mrb[0].mxu0
        %256 = vdwg.mxu0
        %v257 = vmax.f32 %v254, 0.0
        %v258 = vld [vmem:[#allocation2] sm:$0xff]
        %v259 = vld [vmem:[#allocation2 + $0x8] sm:$0xff]
        %v260 = vld [vmem:[#allocation2 + $0x10] sm:$0xff]
        %v261 = vld [vmem:[#allocation2 + $0x18] sm:$0xff]
        %v262 = vld [vmem:[#allocation2 + $0x20] sm:$0xff]
        %v263 = vld [vmem:[#allocation2 + $0x28] sm:$0xff]
        %v264 = vld [vmem:[#allocation2 + $0x30] sm:$0xff]
        %v265 = vld [vmem:[#allocation2 + $0x38] sm:$0xff]
        %v266 = vld [vmem:[#allocation2 + $0x40] sm:$0xff]
        %v267 = vld [vmem:[#allocation2 + $0x48] sm:$0xff]
        %v268 = vld [vmem:[#allocation2 + $0x50] sm:$0xff]
        %v269 = vld [vmem:[#allocation2 + $0x58] sm:$0xff]
        %v270 = vld [vmem:[#allocation2 + $0x60] sm:$0xff]
        %v271 = vld [vmem:[#allocation2 + $0x68] sm:$0xff]
        %v272 = vld [vmem:[#allocation2 + $0x70] sm:$0xff]
        %v273 = vld [vmem:[#allocation2 + $0x78] sm:$0xff]
        %274 = vmatprep.subr.mxu0 0.0
        %275 = vmatpush1.msra.mxu0 %v258
        %276 = vmatprep.subr.mxu0 0.0
        %277 = vmatpush1.msra.mxu0 %v259
        %278 = vmatprep.subr.mxu0 0.0
        %279 = vmatpush1.msra.mxu0 %v260
        %280 = vmatprep.subr.mxu0 0.0
        %281 = vmatpush1.msra.mxu0 %v261
        %282 = vmatprep.subr.mxu0 0.0
        %283 = vmatpush1.msra.mxu0 %v262
        %284 = vmatprep.subr.mxu0 0.0
        %285 = vmatpush1.msra.mxu0 %v263
        %286 = vmatprep.subr.mxu0 0.0
        %287 = vmatpush1.msra.mxu0 %v264
        %288 = vmatprep.subr.mxu0 0.0
        %289 = vmatpush1.msra.mxu0 %v265
        %290 = vmatprep.subr.mxu0 0.0
        %291 = vmatpush1.msra.mxu0 %v266
        %292 = vmatprep.subr.mxu0 0.0
        %293 = vmatpush1.msra.mxu0 %v267
        %294 = vmatprep.subr.mxu0 0.0
        %295 = vmatpush1.msra.mxu0 %v268
        %296 = vmatprep.subr.mxu0 0.0
        %297 = vmatpush1.msra.mxu0 %v269
        %298 = vmatprep.subr.mxu0 0.0
        %299 = vmatpush1.msra.mxu0 %v270
        %300 = vmatprep.subr.mxu0 0.0
        %301 = vmatpush1.msra.mxu0 %v271
        %302 = vmatprep.subr.mxu0 0.0
        %303 = vmatpush1.msra.mxu0 %v272
        %304 = vmatprep.subr.mxu0 0.0
        %305 = vmatpush1.msra.mxu0 %v273
        %306 = vmatprep.subr.mxu0 0.0
        %307 = vmatpush1.msra.mxu0 0.0
        %308 = vmatprep.subr.mxu0 0.0
        %309 = vmatpush1.msra.mxu0 0.0
        %310 = vmatprep.subr.mxu0 0.0
        %311 = vmatpush1.msra.mxu0 0.0
        %312 = vmatprep.subr.mxu0 0.0
        %313 = vmatpush1.msra.mxu0 0.0
        %314 = vmatprep.subr.mxu0 0.0
        %315 = vmatpush1.msra.mxu0 0.0
        %316 = vmatprep.subr.mxu0 0.0
        %317 = vmatpush1.msra.mxu0 0.0
        %318 = vmatprep.subr.mxu0 0.0
        %319 = vmatpush1.msra.mxu0 0.0
        %320 = vmatprep.subr.mxu0 0.0
        %321 = vmatpush1.msra.mxu0 0.0
        %322 = vmatprep.subr.mxu0 0.0
        %323 = vmatpush1.msra.mxu0 0.0
        %324 = vmatprep.subr.mxu0 0.0
        %325 = vmatpush1.msra.mxu0 0.0
        %326 = vmatprep.subr.mxu0 0.0
        %327 = vmatpush1.msra.mxu0 0.0
        %328 = vmatprep.subr.mxu0 0.0
        %329 = vmatpush1.msra.mxu0 0.0
        %330 = vmatprep.subr.mxu0 0.0
        %331 = vmatpush1.msra.mxu0 0.0
        %332 = vmatprep.subr.mxu0 0.0
        %333 = vmatpush1.msra.mxu0 0.0
        %334 = vmatprep.subr.mxu0 0.0
        %335 = vmatpush1.msra.mxu0 0.0
        %336 = vmatprep.subr.mxu0 0.0
        %337 = vmatpush1.msra.mxu0 0.0
        %338 = vmatprep.mubr.f32.mxu0 0.0
        %339 = vmatmul.mubr.f32.gmra.mrb[0].mxu0 %v257
        %v340 = vpop.f32.mrb[0].mxu0
        %v341 = vadd.f32 0.0, %v340
        %v342 = vpop.f32.mrb[0].mxu0
        %343 = vdwg.mxu0
        %344 = vst [vmem:[%s176] sm:$0xff] %v341
        %s345 = sand.u32 %s94, 1
        %s346 = scalar_lea.sflag [#allocation4], %s345
        %s347 = sand.u32 %s94, 1
        %s348 = smul.addr %s347, 8
        %s349 = scalar_lea.vmem [#allocation5], %s348
        // Predicated region
        $region37: #{tpu_custom_call.1} parent=31 // pred_check
          %p350 = pneg %p104
        $region38: #{tpu_custom_call.1} parent=31 // pred_check_branch
          %352 = sbr.rel (%p350) target = $region40
        $region39: #{tpu_custom_call.1} parent=31 // pred_region
          %s354 = ssub.s32 128, 128
          %355 = vsyncadd %s346, %s354
          %s356 = smul.addr %s18, 128
          %s357 = scalar_lea.hbm %s3, %s356
          %s359 = sshll.u32 %s349, 4
          %s360 = int_to_ptr.vmem [resolvable:$true] %s359
          %362 = dma.vmem_to_hbm [thread:$0]  %s360, 128, %s357, %s346
        $region40: #{tpu_custom_call.1} parent=31 // pred_fallthru
          _
      $region32: #{tpu_custom_call.1} parent=5 // pred_fallthru
        _
      %p363 = scmp.le.s32.totalorder 2, %s13
      // Predicated region
      $region41: #{tpu_custom_call.1} parent=5 // pred_check
        %p364 = pneg %p363
      $region42: #{tpu_custom_call.1} parent=5 // pred_check_branch
        %366 = sbr.rel (%p364) target = $region44
      $region43: #{tpu_custom_call.1} parent=5 // pred_region
        %s367 = ssub.s32 %s13, 2
        // Predicated region
        $region45: #{tpu_custom_call.1} parent=43 // pred_check
          %p368 = pneg %p110
        $region46: #{tpu_custom_call.1} parent=43 // pred_check_branch
          %370 = sbr.rel (%p368) target = $region48
        $region47: #{tpu_custom_call.1} parent=43 // pred_region
          %s371 = sand.u32 %s95, 1
          %s372 = scalar_lea.sflag [#allocation4], %s371
          %s373 = sand.u32 %s95, 1
          %s374 = smul.addr %s373, 8
          %s375 = scalar_lea.vmem [#allocation5], %s374
          %376 = dma.done %s372, 128
        $region48: #{tpu_custom_call.1} parent=43 // pred_fallthru
          _
      $region44: #{tpu_custom_call.1} parent=5 // pred_fallthru
        _
    $region6: #{tpu_custom_call.1} parent=1 // loop_footer
      %s17 = sadd.s32 1, %s13
    $region7: #{tpu_custom_call.1} parent=1 // loop_footer_branch
      %12 = sbr.rel target = $region3
    $region8: #{tpu_custom_call.1} parent=1 // loop_exit
      _
    %377 = vsyncpa [#allocation3], 1
    %s378 = scalar_lea.sflag [#allocation3], 1
    %379 = vsyncpa %s378, 1
    %380 = vsyncpa [#allocation4], 1
    %s381 = scalar_lea.sflag [#allocation4], 1
    %382 = vsyncpa %s381, 1

</llo_original>
